<compile_context>
chip_gen: v6e
topology: v6e:2x2x1
jax: 0.10.0
libtpu: 0.0.40
codegen_flags: <defaults>
</compile_context>

<pallas_src>
import functools

import jax
import jax.numpy as jnp
from jax.experimental import pallas as pl
from jax.experimental.pallas import tpu as pltpu


# --------------------------- tiling helpers ---------------------------

TM = 256                                # target rows per block (sublane axis)
VMEM_LIMIT_BYTES = 48 * 1024 * 1024     # above v5e(16M)/v6e(32M) defaults, below v7x physical


def _tile(dim, target, align):
    """Largest multiple of `align` that divides `dim` and is <= target; else full dim."""
    if dim <= target:
        return dim
    if dim % align:
        return dim
    t = (min(target, dim) // align) * align
    while t >= align:
        if dim % t == 0:
            return t
        t -= align
    return dim


def _layernorm(x, g, b, eps=1e-5):
    # biased variance + eps=1e-5, matching torch.nn.LayerNorm
    mean = jnp.mean(x, axis=-1, keepdims=True)
    var = jnp.mean((x - mean) ** 2, axis=-1, keepdims=True)
    return (x - mean) * jax.lax.rsqrt(var + eps) * g + b


# --------------------------- Pallas kernels ---------------------------

def layernorm_kernel(x_ref, g_ref, b_ref, o_ref):
    o_ref[...] = _layernorm(x_ref[...], g_ref[...], b_ref[...])


def ln_qkv_kernel(x_ref, g_ref, b_ref, w_ref, o_ref):
    # fused: LayerNorm prologue + (no-bias) QKV projection.  Wqkv = concat(wq*scale, wk, wv)
    # is a constant-index block -> DMA'd once for the whole grid.
    h = _layernorm(x_ref[...], g_ref[...], b_ref[...])
    o_ref[...] = jnp.dot(h.astype(jnp.bfloat16), w_ref[...],
                         preferred_element_type=jnp.float32).astype(o_ref.dtype)


def attention_kernel(qkv_ref, wo_ref, bo_ref, res_ref, o_ref, ctx_ref, *, heads, dim_head):
    # One batch per grid step.  Per-head softmax(QK^T)V is written straight into the VMEM
    # ctx scratch slab (no list/concat), then the out-projection + bias + residual epilogue
    # runs on the already-resident ctx, emitting the f32 residual stream directly.
    # Softmax scale was folded into Wq at prep time.
    # TODO(synk): for long sequences, switch to a flash-style KV-tiled online softmax with a
    # (B, q-block) grid and head-batched dot_general instead of the full (S, S) score matrix.
    inner = heads * dim_head
    qkv = qkv_ref[0]                                      # (S, 3*inner) bf16
    for h in range(heads):
        lo = h * dim_head
        hi = lo + dim_head
        q = qkv[:, lo:hi]                                 # (S, Dh)
        k = qkv[:, inner + lo:inner + hi]
        v = qkv[:, 2 * inner + lo:2 * inner + hi]
        s = jnp.dot(q, k.T, preferred_element_type=jnp.float32)        # (S, S) f32
        s = s - jnp.max(s, axis=-1, keepdims=True)
        p = jnp.exp(s)
        p = p * pl.reciprocal(jnp.sum(p, axis=-1, keepdims=True), approx=True)
        ctx_ref[:, lo:hi] = jnp.dot(p.astype(qkv.dtype), v,
                                    preferred_element_type=jnp.float32)  # (S, Dh) f32
    y = jnp.dot(ctx_ref[...].astype(jnp.bfloat16), wo_ref[...],
                preferred_element_type=jnp.float32)                      # (S, D) f32
    o_ref[0] = y + bo_ref[...] + res_ref[0]


def ff_block_kernel(x_ref, g_ref, b_ref, w1_ref, b1_ref, w2_ref, b2_ref, o_ref):
    # fully fused FF block: LayerNorm + W1 + b1 + exact erf-GELU + W2 + b2 + residual.
    # The (tm, F) GELU activation lives only in VMEM/vregs; W1/W2 are constant-index blocks.
    x = x_ref[...]
    h = _layernorm(x, g_ref[...], b_ref[...]).astype(jnp.bfloat16)
    y = jnp.dot(h, w1_ref[...], preferred_element_type=jnp.float32) + b1_ref[...]
    y = 0.5 * y * (1.0 + jax.lax.erf(y * (2.0 ** -0.5)))   # nn.GELU default (exact erf)
    z = jnp.dot(y.astype(jnp.bfloat16), w2_ref[...], preferred_element_type=jnp.float32)
    o_ref[...] = z + b2_ref[...] + x                        # residual is the LN input itself


# --------------------------- pallas_call wrappers ---------------------------

def pallas_layernorm(x, gamma, beta):
    """gamma/beta already (1, D) f32 from prepare_params."""
    M, D = x.shape
    tm = _tile(M, TM, 8)
    return pl.pallas_call(
        layernorm_kernel,
        out_shape=jax.ShapeDtypeStruct((M, D), jnp.float32),
        grid=(M // tm,),
        in_specs=[pl.BlockSpec((tm, D), lambda i: (i, 0)),
                  pl.BlockSpec((1, D), lambda i: (0, 0)),
                  pl.BlockSpec((1, D), lambda i: (0, 0))],
        out_specs=pl.BlockSpec((tm, D), lambda i: (i, 0)),
        compiler_params=pltpu.CompilerParams(dimension_semantics=("parallel",)),
    )(x, gamma, beta)


def pallas_ln_qkv(x, gamma, beta, wqkv):
    """bf16 output of LN(x) @ Wqkv  (no bias, scale pre-folded into Wq)."""
    M, D = x.shape
    N = wqkv.shape[1]
    tm = _tile(M, TM, 8)
    return pl.pallas_call(
        ln_qkv_kernel,
        out_shape=jax.ShapeDtypeStruct((M, N), jnp.bfloat16),
        grid=(M // tm,),
        in_specs=[pl.BlockSpec((tm, D), lambda i: (i, 0)),
                  pl.BlockSpec((1, D), lambda i: (0, 0)),
                  pl.BlockSpec((1, D), lambda i: (0, 0)),
                  pl.BlockSpec((D, N), lambda i: (0, 0))],     # constant -> loaded once
        out_specs=pl.BlockSpec((tm, N), lambda i: (i, 0)),
        compiler_params=pltpu.CompilerParams(
            dimension_semantics=("parallel",),
            vmem_limit_bytes=VMEM_LIMIT_BYTES),
    )(x, gamma, beta, wqkv)


def pallas_attention_out(qkv, wo, bo, residual, *, heads, dim_head):
    """qkv: (B, S, 3*inner) bf16; residual: (B, S, D) f32 -> (B, S, D) f32 = residual + attn_out."""
    B, S, three_inner = qkv.shape
    inner = heads * dim_head
    D = wo.shape[1]
    kern = functools.partial(attention_kernel, heads=heads, dim_head=dim_head)
    return pl.pallas_call(
        kern,
        out_shape=jax.ShapeDtypeStruct((B, S, D), jnp.float32),
        grid=(B,),
        in_specs=[pl.BlockSpec((1, S, three_inner), lambda b: (b, 0, 0)),
                  pl.BlockSpec((inner, D), lambda b: (0, 0)),   # Wo resident in VMEM
                  pl.BlockSpec((1, D), lambda b: (0, 0)),
                  pl.BlockSpec((1, S, D), lambda b: (b, 0, 0))],
        out_specs=pl.BlockSpec((1, S, D), lambda b: (b, 0, 0)),
        scratch_shapes=[pltpu.VMEM((S, inner), jnp.float32)],
        compiler_params=pltpu.CompilerParams(
            dimension_semantics=("parallel",),
            vmem_limit_bytes=VMEM_LIMIT_BYTES),
    )(qkv, wo, bo, residual)


def pallas_ff_block(x, gamma, beta, w1, b1, w2, b2):
    """f32 output of x + W2(GELU(LN(x) @ W1 + b1)) + b2, fully fused."""
    M, D = x.shape
    F = w1.shape[1]
    tm = _tile(M, TM, 8)
    return pl.pallas_call(
        ff_block_kernel,
        out_shape=jax.ShapeDtypeStruct((M, D), jnp.float32),
        grid=(M // tm,),
        in_specs=[pl.BlockSpec((tm, D), lambda i: (i, 0)),
                  pl.BlockSpec((1, D), lambda i: (0, 0)),
                  pl.BlockSpec((1, D), lambda i: (0, 0)),
                  pl.BlockSpec((D, F), lambda i: (0, 0)),       # W1 loaded once
                  pl.BlockSpec((1, F), lambda i: (0, 0)),
                  pl.BlockSpec((F, D), lambda i: (0, 0)),       # W2 loaded once
                  pl.BlockSpec((1, D), lambda i: (0, 0))],
        out_specs=pl.BlockSpec((tm, D), lambda i: (i, 0)),
        compiler_params=pltpu.CompilerParams(
            dimension_semantics=("parallel",),
            vmem_limit_bytes=VMEM_LIMIT_BYTES),
    )(x, gamma, beta, w1, b1, w2, b2)


# --------------------------- parameter prep (hoisted off the forward path) ---------------------------

def prepare_params(params, cfg):
    """Precompute bf16 weight-stationary matrices, fold the softmax scale into Wq,
    and reshape LN params / biases to (1, N) f32 — once, outside the forward."""
    D, H, Dh = cfg["dim"], cfg["heads"], cfg["dim_head"]
    scale = Dh ** -0.5
    prepped = {
        "token_emb": params["token_emb"],
        "pos_emb": params["pos_emb"],
        "lnf_g": params["lnf_g"].reshape(1, D).astype(jnp.float32),
        "lnf_b": params["lnf_b"].reshape(1, D).astype(jnp.float32),
        "layers": [],
    }
    for layer in params["layers"]:
        F = layer["w1"].shape[1]
        prepped["layers"].append(dict(
            ln1_g=layer["ln1_g"].reshape(1, D).astype(jnp.float32),
            ln1_b=layer["ln1_b"].reshape(1, D).astype(jnp.float32),
            wqkv=jnp.concatenate([layer["wq"] * scale, layer["wk"], layer["wv"]],
                                 axis=1).astype(jnp.bfloat16),
            wo=layer["wo"].astype(jnp.bfloat16),
            bo=layer["bo"].reshape(1, D).astype(jnp.float32),
            ln2_g=layer["ln2_g"].reshape(1, D).astype(jnp.float32),
            ln2_b=layer["ln2_b"].reshape(1, D).astype(jnp.float32),
            w1=layer["w1"].astype(jnp.bfloat16),
            b1=layer["b1"].reshape(1, F).astype(jnp.float32),
            w2=layer["w2"].astype(jnp.bfloat16),
            b2=layer["b2"].reshape(1, D).astype(jnp.float32),
        ))
    return prepped


# --------------------------- model forward ---------------------------

def bert_embedder_forward(tokens, prepped, cfg):
    B, S = tokens.shape
    D, H, Dh = cfg["dim"], cfg["heads"], cfg["dim_head"]
    inner = H * Dh

    # embedding lookup + absolute positional embedding (gather glue, plain JAX)
    x = prepped["token_emb"][tokens] + prepped["pos_emb"][:S][None, :, :]
    x2 = x.reshape(B * S, D).astype(jnp.float32)            # f32 residual stream

    for layer in prepped["layers"]:
        # ---- self-attention block (pre-norm, residual), out-proj fused into attention ----
        qkv = pallas_ln_qkv(x2, layer["ln1_g"], layer["ln1_b"], layer["wqkv"])
        x2 = pallas_attention_out(qkv.reshape(B, S, 3 * inner),
                                  layer["wo"], layer["bo"],
                                  x2.reshape(B, S, D),
                                  heads=H, dim_head=Dh).reshape(B * S, D)

        # ---- feed-forward block (pre-norm, residual), fully fused ----
        x2 = pallas_ff_block(x2, layer["ln2_g"], layer["ln2_b"],
                             layer["w1"], layer["b1"], layer["w2"], layer["b2"])

    # final LayerNorm of TransformerWrapper; return_embeddings=True -> no logits head
    x2 = pallas_layernorm(x2, prepped["lnf_g"], prepped["lnf_b"])
    return x2.reshape(B, S, D)


# --------------------------- deterministic parameter init ---------------------------

def init_params(key, cfg):
    D, H, Dh = cfg["dim"], cfg["heads"], cfg["dim_head"]
    inner = H * Dh
    F = D * cfg["ff_mult"]

    def nrm(k, shape, std=0.02):
        return jax.random.normal(k, shape, jnp.float32) * std

    keys = iter(jax.random.split(key, 8 + 8 * cfg["depth"]))
    params = {
        "token_emb": nrm(next(keys), (cfg["vocab_size"], D)),
        "pos_emb": nrm(next(keys), (cfg["max_seq_len"], D)),
        "lnf_g": jnp.ones((D,), jnp.float32),
        "lnf_b": jnp.zeros((D,), jnp.float32),
        "layers": [],
    }
    for _ in range(cfg["depth"]):
        params["layers"].append(dict(
            ln1_g=jnp.ones((D,), jnp.float32), ln1_b=jnp.zeros((D,), jnp.float32),
            wq=nrm(next(keys), (D, inner)),
            wk=nrm(next(keys), (D, inner)),
            wv=nrm(next(keys), (D, inner)),
            wo=nrm(next(keys), (inner, D)), bo=jnp.zeros((D,), jnp.float32),
            ln2_g=jnp.ones((D,), jnp.float32), ln2_b=jnp.zeros((D,), jnp.float32),
            w1=nrm(next(keys), (D, F)), b1=jnp.zeros((F,), jnp.float32),
            w2=nrm(next(keys), (F, D)), b2=jnp.zeros((D,), jnp.float32),
        ))
    return params


# --------------------------- main ---------------------------

if __name__ == "__main__":
    # TODO(synk): BERTTokenizer (HuggingFace string->ids) has no Pallas equivalent;
    # we feed token ids directly (use_tokenizer=False path).
    cfg = dict(dim=32,          # n_embed
               depth=2,         # n_layer
               heads=4, dim_head=8, ff_mult=4,
               vocab_size=1000, max_seq_len=16)
    B, S = 2, 8

    root = jax.random.PRNGKey(0)
    pkey, tkey = jax.random.split(root)
    params = init_params(pkey, cfg)
    prepped = prepare_params(params, cfg)
    tokens = jax.random.randint(tkey, (B, S), 0, cfg["vocab_size"], dtype=jnp.int32)

    z = bert_embedder_forward(tokens, prepped, cfg)
    z = jax.block_until_ready(z)
    assert z.shape == (B, S, cfg["dim"]) and z.dtype == jnp.float32
    print("KERNEL_OK")
</pallas_src>

<mosaic_0001>
module attributes {stable_mosaic.version = 11 : i64} {
  func.func @ln_qkv_kernel(%arg0: i32, %arg1: memref<16x32xf32, #tpu.memory_space<vmem>>, %arg2: memref<1x32xf32, #tpu.memory_space<vmem>>, %arg3: memref<1x32xf32, #tpu.memory_space<vmem>>, %arg4: memref<32x96xbf16, #tpu.memory_space<vmem>>, %arg5: memref<16x96xbf16, #tpu.memory_space<vmem>>) attributes {dimension_semantics = [#tpu.dimension_semantics<parallel>], iteration_bounds = array<i64: 1>, scalar_prefetch = 0 : i64, scratch_operands = 0 : i64, tpu.core_type = #tpu.core_type<tc>, window_params = [{transform_indices = @transform_0, window_bounds = array<i64: 16, 32>}, {pipeline_mode = #tpu.pipeline_mode<synchronous>, transform_indices = @transform_1, window_bounds = array<i64: 1, 32>}, {pipeline_mode = #tpu.pipeline_mode<synchronous>, transform_indices = @transform_2, window_bounds = array<i64: 1, 32>}, {pipeline_mode = #tpu.pipeline_mode<synchronous>, transform_indices = @transform_3, window_bounds = array<i64: 32, 96>}, {transform_indices = @transform_4, window_bounds = array<i64: 16, 96>}]} {
    %c0 = arith.constant 0 : index
    %c0_0 = arith.constant 0 : index
    %0 = vector.load %arg1[%c0, %c0_0] : memref<16x32xf32, #tpu.memory_space<vmem>>, vector<16x32xf32>
    %c0_1 = arith.constant 0 : index
    %c0_2 = arith.constant 0 : index
    %1 = vector.load %arg2[%c0_1, %c0_2] : memref<1x32xf32, #tpu.memory_space<vmem>>, vector<1x32xf32>
    %c0_3 = arith.constant 0 : index
    %c0_4 = arith.constant 0 : index
    %2 = vector.load %arg3[%c0_3, %c0_4] : memref<1x32xf32, #tpu.memory_space<vmem>>, vector<1x32xf32>
    %cst = arith.constant dense<0.000000e+00> : vector<16xf32>
    %3 = vector.multi_reduction <add>, %0, %cst [1] : vector<16x32xf32> to vector<16xf32>
    %4 = vector.shape_cast %3 : vector<16xf32> to vector<16x1xf32>
    %cst_5 = arith.constant 3.200000e+01 : f32
    %5 = vector.broadcast %cst_5 : f32 to vector<16x1xf32>
    %6 = arith.divf %4, %5 : vector<16x1xf32>
    %7 = vector.broadcast %6 : vector<16x1xf32> to vector<16x32xf32>
    %8 = arith.subf %0, %7 : vector<16x32xf32>
    %9 = arith.mulf %8, %8 : vector<16x32xf32>
    %cst_6 = arith.constant dense<0.000000e+00> : vector<16xf32>
    %10 = vector.multi_reduction <add>, %9, %cst_6 [1] : vector<16x32xf32> to vector<16xf32>
    %11 = vector.shape_cast %10 : vector<16xf32> to vector<16x1xf32>
    %cst_7 = arith.constant 3.200000e+01 : f32
    %12 = vector.broadcast %cst_7 : f32 to vector<16x1xf32>
    %13 = arith.divf %11, %12 : vector<16x1xf32>
    %14 = vector.broadcast %6 : vector<16x1xf32> to vector<16x32xf32>
    %15 = arith.subf %0, %14 : vector<16x32xf32>
    %cst_8 = arith.constant 9.99999974E-6 : f32
    %16 = vector.broadcast %cst_8 : f32 to vector<16x1xf32>
    %17 = arith.addf %13, %16 : vector<16x1xf32>
    %18 = math.rsqrt %17 : vector<16x1xf32>
    %19 = vector.broadcast %18 : vector<16x1xf32> to vector<16x32xf32>
    %20 = arith.mulf %15, %19 : vector<16x32xf32>
    %21 = vector.broadcast %1 : vector<1x32xf32> to vector<16x32xf32>
    %22 = arith.mulf %20, %21 : vector<16x32xf32>
    %23 = vector.broadcast %2 : vector<1x32xf32> to vector<16x32xf32>
    %24 = arith.addf %22, %23 : vector<16x32xf32>
    %25 = arith.truncf %24 : vector<16x32xf32> to vector<16x32xbf16>
    %c0_9 = arith.constant 0 : index
    %c0_10 = arith.constant 0 : index
    %26 = vector.load %arg4[%c0_9, %c0_10] : memref<32x96xbf16, #tpu.memory_space<vmem>>, vector<32x96xbf16>
    %cst_11 = arith.constant dense<0.000000e+00> : vector<16x96xf32>
    %27 = tpu.matmul %25, %26, %cst_11 {dimension_numbers = #tpu.dot_dimension_numbers<[1], [0], [0], [1], [0, 0, 1, 1], [], []>} : vector<16x32xbf16>, vector<32x96xbf16>, vector<16x96xf32> -> vector<16x96xf32>
    %28 = arith.truncf %27 : vector<16x96xf32> to vector<16x96xbf16>
    %c0_12 = arith.constant 0 : index
    %c0_13 = arith.constant 0 : index
    %29 = vector.load %arg5[%c0_12, %c0_13] : memref<16x96xbf16, #tpu.memory_space<vmem>>, vector<16x96xbf16>
    tpu.vector_store %arg5[%c0_12, %c0_13], %28 {strides = array<i32>} : memref<16x96xbf16, #tpu.memory_space<vmem>>, vector<16x96xbf16>,
    return
  }
  func.func @transform_0(%arg0: i32) -> (i32, i32) {
    %c0_i32 = arith.constant 0 : i32
    %c0_i32_0 = arith.constant 0 : i32
    return %arg0, %c0_i32 : i32, i32
  }
  func.func @transform_1(%arg0: i32) -> (i32, i32) {
    %c0_i32 = arith.constant 0 : i32
    %c0_i32_0 = arith.constant 0 : i32
    %c0_i32_1 = arith.constant 0 : i32
    return %c0_i32, %c0_i32_0 : i32, i32
  }
  func.func @transform_2(%arg0: i32) -> (i32, i32) {
    %c0_i32 = arith.constant 0 : i32
    %c0_i32_0 = arith.constant 0 : i32
    %c0_i32_1 = arith.constant 0 : i32
    return %c0_i32, %c0_i32_0 : i32, i32
  }
  func.func @transform_3(%arg0: i32) -> (i32, i32) {
    %c0_i32 = arith.constant 0 : i32
    %c0_i32_0 = arith.constant 0 : i32
    %c0_i32_1 = arith.constant 0 : i32
    return %c0_i32, %c0_i32_0 : i32, i32
  }
  func.func @transform_4(%arg0: i32) -> (i32, i32) {
    %c0_i32 = arith.constant 0 : i32
    %c0_i32_0 = arith.constant 0 : i32
    return %arg0, %c0_i32 : i32, i32
  }
}

</mosaic_0001>

<llo_original>
// kernel: tpu_custom_call.1
$region0: #{tpu_custom_call.1}
  #allocation0 [shape = 'u32[]', space=smem, size = 0x4, offset = 0x4, fixed_abs, tag = 'smem constant byte address 0x4 - core index']
  #allocation1 [shape = 'u32[144,128]{1,0:T(1,128)}', space=vmem, size = 0x12000, scoped, tag = 'internal scratch']
  %s0 = inlined_call_operand.hbm [shape: f32[16,32], index: 0, kind: input, shape index: {}]
  %s1 = inlined_call_operand.vmem [shape: f32[1,32], index: 1, kind: input, shape index: {}]
  %s2 = inlined_call_operand.vmem [shape: f32[1,32], index: 2, kind: input, shape index: {}]
  %s3 = inlined_call_operand.hbm [shape: bf16[32,96], index: 3, kind: input, shape index: {}]
  %s4 = inlined_call_operand.hbm [shape: bf16[16,96], index: 4, kind: output, shape index: {}]
  %s5 = sld [smem:[#allocation0]]
  $region34: #{tpu_custom_call.1} parent=0
    _
  %s7 = ssub.s32 1, %s5
  %s8 = scalar_select 0, %s7, %s5
  $region1: #{tpu_custom_call.1} parent=0
    #allocation2 [shape = 'u8[8192]{0}', space=vmem, size = 0x2000, scoped, tag = 'input window, operand 0, single buffered']
    #allocation3 [shape = 's32[1]{0}', space=sflag, size = 0x4, scoped, tag = 'scoped memory for tpu_custom_call.1']
    #allocation4 [shape = 's32[1]{0}', space=sflag, size = 0x4, scoped, tag = 'scoped memory for tpu_custom_call.1']
    #allocation5 [shape = 'u8[8192]{0}', space=vmem, size = 0x2000, scoped, tag = 'input window, operand 3, single buffered']
    #allocation6 [shape = 's32[1]{0}', space=sflag, size = 0x4, scoped, tag = 'scoped memory for tpu_custom_call.1']
    #allocation7 [shape = 'u8[4096]{0}', space=vmem, size = 0x1000, scoped, tag = 'output window, operand 0, single buffered']
    %9 = vsyncpa [#allocation3], 0
    %10 = vsyncpa [#allocation6], 0
    %11 = vsyncpa [#allocation4], 0
    // Predicated region
    $region2: #{tpu_custom_call.1} parent=1 // pred_check
      _
    $region3: #{tpu_custom_call.1} parent=1 // pred_check_branch
      %13 = sbr.rel (0) target = $region5
    $region4: #{tpu_custom_call.1} parent=1 // pred_region
      %s15 = ssub.s32 256, 256
      %16 = vsyncadd [#allocation3], %s15
      %s17 = sshll.u32 [#allocation2], 4
      %s18 = int_to_ptr.vmem [resolvable:$true] %s17
      %23 = dma.hbm_to_vmem [thread:$0]  %s0, 256, %s18, [#allocation3], 128, 128, 8
    $region5: #{tpu_custom_call.1} parent=1 // pred_fallthru
      _
    // Predicated region
    $region6: #{tpu_custom_call.1} parent=1 // pred_check
      _
    $region7: #{tpu_custom_call.1} parent=1 // pred_check_branch
      %25 = sbr.rel (0) target = $region9
    $region8: #{tpu_custom_call.1} parent=1 // pred_region
      _
    $region9: #{tpu_custom_call.1} parent=1 // pred_fallthru
      _
    // Predicated region
    $region10: #{tpu_custom_call.1} parent=1 // pred_check
      _
    $region11: #{tpu_custom_call.1} parent=1 // pred_check_branch
      %27 = sbr.rel (0) target = $region13
    $region12: #{tpu_custom_call.1} parent=1 // pred_region
      _
    $region13: #{tpu_custom_call.1} parent=1 // pred_fallthru
      _
    // Predicated region
    $region14: #{tpu_custom_call.1} parent=1 // pred_check
      _
    $region15: #{tpu_custom_call.1} parent=1 // pred_check_branch
      %29 = sbr.rel (0) target = $region17
    $region16: #{tpu_custom_call.1} parent=1 // pred_region
      %s31 = ssub.s32 256, 256
      %32 = vsyncadd [#allocation6], %s31
      %s33 = sshll.u32 [#allocation5], 4
      %s34 = int_to_ptr.vmem [resolvable:$true] %s33
      %39 = dma.hbm_to_vmem [thread:$0]  %s3, 256, %s34, [#allocation6], 64, 64, 4
    $region17: #{tpu_custom_call.1} parent=1 // pred_fallthru
      _
    // Predicated region
    $region18: #{tpu_custom_call.1} parent=1 // pred_check
      _
    $region19: #{tpu_custom_call.1} parent=1 // pred_check_branch
      %41 = sbr.rel (0) target = $region21
    $region20: #{tpu_custom_call.1} parent=1 // pred_region
      %42 = dma.done [#allocation3], 256
    $region21: #{tpu_custom_call.1} parent=1 // pred_fallthru
      _
    // Predicated region
    $region22: #{tpu_custom_call.1} parent=1 // pred_check
      _
    $region23: #{tpu_custom_call.1} parent=1 // pred_check_branch
      %44 = sbr.rel (0) target = $region25
    $region24: #{tpu_custom_call.1} parent=1 // pred_region
      %45 = dma.done [#allocation6], 256
    $region25: #{tpu_custom_call.1} parent=1 // pred_fallthru
      _
    %v47 = vld [vmem:[#allocation2] sm:$0xff]
    %v48 = vld [vmem:[#allocation2 + $0x8] sm:$0xff]
    %v49 = vld [vmem:[%s1] sm:$0x1]
    %v50 = vld [vmem:[%s2] sm:$0x1]
    %vm51 = vcmask 261120
    %v52 = vsel %vm51, %v47, 0.0
    %53 = vadd.xlane.f32.xlu0 %v52
    %v54 = vpop.xlane.xlu0 %53
    %v55 = vsel %vm51, %v48, 0.0
    %56 = vadd.xlane.f32.xlu0 %v55
    %v57 = vpop.xlane.xlu0 %56
    %v58 = vrcp.pop 32.0
    %v59 = vmul.f32 %v54, %v58
    %v60 = vmul.f32 %v57, %v58
    %v61 = vsub.f32 %v47, %v59
    %v62 = vsub.f32 %v48, %v60
    %v63 = vmul.f32 %v61, %v61
    %v64 = vmul.f32 %v62, %v62
    %v65 = vsel %vm51, %v63, 0.0
    %66 = vadd.xlane.f32.xlu0 %v65
    %v67 = vpop.xlane.xlu0 %66
    %v68 = vsel %vm51, %v64, 0.0
    %69 = vadd.xlane.f32.xlu0 %v68
    %v70 = vpop.xlane.xlu0 %69
    %v71 = vmul.f32 %v67, %v58
    %v72 = vmul.f32 %v70, %v58
    %v73 = vadd.f32 %v71, 1e-05
    %v74 = vadd.f32 %v72, 1e-05
    %v75 = vrsqrt.pop %v73
    %v76 = vrsqrt.pop %v74
    %v77 = vmul.f32 %v61, %v75
    %v78 = vmul.f32 %v62, %v76
    %v80 = vlaneseq
    %v81 = vshrl.u32 %v80, 7
    %v82 = vsub.s32 0, %v81
    %v83 = vrot.slane %v49, %v82
    %v85 = vmul.f32 %v77, %v83
    %v86 = vmul.f32 %v78, %v83
    %v88 = vlaneseq
    %v89 = vshrl.u32 %v88, 7
    %v90 = vsub.s32 0, %v89
    %v91 = vrot.slane %v50, %v90
    %v93 = vadd.f32 %v85, %v91
    %v94 = vadd.f32 %v86, %v91
    %v95 = vpack.c.bf16 %v94, %v93
    %v96 = vld [vmem:[#allocation5] sm:$0xf]
    %v97 = vld [vmem:[#allocation5 + $0x4] sm:$0xf]
    %v98 = vld [vmem:[#allocation5 + $0x8] sm:$0xf]
    %v99 = vld [vmem:[#allocation5 + $0xc] sm:$0xf]
    %v104 = vunpack.c.l.b16 %v96
    %v105 = vunpack.c.l.b16 %v97
    %v106 = vunpack.c.l.b16 %v98
    %v107 = vunpack.c.l.b16 %v99
    %v108 = vpack.c.b16 %v105, %v104
    %v109 = vpack.c.b16 %v107, %v106
    %v113 = vsel %vm51, %v95, 0
    %115 = vmatprep.subr.bf16.mxu0 0
    %116 = vmatpush1.bf16.msra.mxu0 0
    %117 = vmatprep.subr.bf16.mxu0 0
    %118 = vmatpush1.bf16.msra.mxu0 0
    %119 = vmatprep.subr.bf16.mxu0 0
    %120 = vmatpush1.bf16.msra.mxu0 0
    %121 = vmatprep.subr.bf16.mxu0 0
    %122 = vmatpush1.bf16.msra.mxu0 0
    %123 = vmatprep.subr.bf16.mxu0 0
    %124 = vmatpush1.bf16.msra.mxu0 0
    %125 = vmatprep.subr.bf16.mxu0 0
    %126 = vmatpush1.bf16.msra.mxu0 0
    %127 = vmatprep.subr.bf16.mxu0 0
    %128 = vmatpush1.bf16.msra.mxu0 %v109
    %129 = vmatprep.subr.bf16.mxu0 0
    %130 = vmatpush1.bf16.msra.mxu0 %v108
    %131 = vmatprep.subr.bf16.mxu0 0
    %132 = vmatpush2.bf16.msra.mxu0 0
    %133 = vmatprep.subr.bf16.mxu0 0
    %134 = vmatpush2.bf16.msra.mxu0 0
    %135 = vmatprep.subr.bf16.mxu0 0
    %136 = vmatpush2.bf16.msra.mxu0 0
    %137 = vmatprep.subr.bf16.mxu0 0
    %138 = vmatpush2.bf16.msra.mxu0 0
    %139 = vmatprep.subr.bf16.mxu0 0
    %140 = vmatpush2.bf16.msra.mxu0 0
    %141 = vmatprep.subr.bf16.mxu0 0
    %142 = vmatpush2.bf16.msra.mxu0 0
    %143 = vmatprep.subr.bf16.mxu0 0
    %144 = vmatpush2.bf16.msra.mxu0 0
    %145 = vmatprep.subr.bf16.mxu0 0
    %146 = vmatpush2.bf16.msra.mxu0 0
    %147 = vmatprep.mubr.bf16.mxu0 0
    %148 = vmatmul.mubr.bf16.gmra.mxu0 %v113
    %v149 = vpop.f32.mrf.mxu0
    %v150 = vadd.f32 0.0, %v149
    %v151 = vpop.f32.mrf.mxu0
    %v152 = vpop.f32.mrf.mxu0
    %v153 = vadd.f32 0.0, %v152
    %v154 = vpop.f32.mrf.mxu0
    %155 = vdwg.mxu0
    %v156 = vpack.c.bf16 %v153, %v150
    %v158 = vunpack.c.l.b16 %v156
    %v159 = vunpack.c.h.b16 %v156
    %v160 = vpack.c.b16 %v158, %v158
    %v161 = vpack.c.b16 %v159, %v159
    %vm164 = vcmask 781312
    %165 = vst.msk [vmem:[#allocation7] sm:$0xf] %vm164, %v160
    %166 = vst.msk [vmem:[#allocation7 + $0x4] sm:$0xf] %vm164, %v161
    // Predicated region
    $region26: #{tpu_custom_call.1} parent=1 // pred_check
      _
    $region27: #{tpu_custom_call.1} parent=1 // pred_check_branch
      %168 = sbr.rel (0) target = $region29
    $region28: #{tpu_custom_call.1} parent=1 // pred_region
      %s170 = ssub.s32 128, 128
      %171 = vsyncadd [#allocation4], %s170
      %s172 = sshll.u32 [#allocation7], 4
      %s173 = int_to_ptr.vmem [resolvable:$true] %s172
      %178 = dma.vmem_to_hbm [thread:$0]  %s173, 128, %s4, [#allocation4], 64, 64, 4
    $region29: #{tpu_custom_call.1} parent=1 // pred_fallthru
      _
    // Predicated region
    $region30: #{tpu_custom_call.1} parent=1 // pred_check
      _
    $region31: #{tpu_custom_call.1} parent=1 // pred_check_branch
      %180 = sbr.rel (0) target = $region33
    $region32: #{tpu_custom_call.1} parent=1 // pred_region
      %181 = dma.done [#allocation4], 128
    $region33: #{tpu_custom_call.1} parent=1 // pred_fallthru
      _
    %182 = vsyncpa [#allocation3], 1
    %183 = vsyncpa [#allocation6], 1
    %184 = vsyncpa [#allocation4], 1

</llo_original>
